<compile_context>
chip_gen: v5e
topology: v5e:2x2
jax: 0.10.0
libtpu: 0.0.40
codegen_flags: <defaults>
</compile_context>

<pallas_src>
import functools

import numpy as np

import jax
import jax.numpy as jnp
from jax.experimental import pallas as pl
from jax.experimental.pallas import tpu as pltpu

BN_EPS = 1e-5


def _rec_kernel(t, eps, x_ref, wb_ref, g_ref, be_ref, p_ref, o_ref):
    """Fused RecEntity forward, fully VMEM-resident.

    x_ref  : (H, M)      input image, lane-dense 2-D layout (M = N*W*C), f32
    wb_ref : (3M, M)     stacked banded conv weights (kh taps stacked on rows), bf16
    g_ref  : (1, M)      BN gamma, channel-tiled, f32
    be_ref : (1, M)      BN beta, channel-tiled, f32
    p_ref  : (M, M)      channel-grouping matrix pre-scaled by 1/(N*H*W), f32
    o_ref  : (H, M)      output, f32
    """
    H, M = x_ref.shape
    x = x_ref[...]
    wb = wb_ref[...]
    p = p_ref[...]
    g = g_ref[...]
    be = be_ref[...]

    # Row masks for the implicit zero padding of the kh = 0 / 2 taps (hoisted:
    # computed once per kernel invocation, reused every recurrence step).
    row = jax.lax.broadcasted_iota(jnp.int32, (H, M), 0)
    not_top = row != 0
    not_bot = row != H - 1

    def f(cur):
        # kh taps == sublane row shifts (XLU roll) with the wrapped row zeroed.
        s0 = jnp.where(not_top, pltpu.roll(cur, shift=1, axis=0), 0.0)      # cur[h-1]
        s2 = jnp.where(not_bot, pltpu.roll(cur, shift=H - 1, axis=0), 0.0)  # cur[h+1]

        # Conv3x3 as one lane-dense (H, 3M) x (3M, M) MXU contraction, bf16 in,
        # f32 accumulate.  (Conv bias omitted: exactly cancelled by training BN.)
        lhs = jnp.concatenate([s0, cur, s2], axis=1).astype(jnp.bfloat16)
        acc = jnp.dot(lhs, wb, preferred_element_type=jnp.float32)

        # BatchNorm2d (training mode): one-pass sum / sum-of-squares, single
        # (2, M) x (M, M) dot against the pre-scaled grouping matrix.
        stats = jnp.concatenate(
            [jnp.sum(acc, axis=0, keepdims=True),
             jnp.sum(acc * acc, axis=0, keepdims=True)], axis=0)
        red = jnp.dot(stats, p, preferred_element_type=jnp.float32)
        mean = red[0:1, :]
        var = jnp.maximum(red[1:2, :] - mean * mean, 0.0)   # clamp: rounding safety

        # BN folded into a single affine, then ReLU.
        scale = g * jax.lax.rsqrt(var + eps)
        shift = be - mean * scale
        return jnp.maximum(acc * scale + shift, 0.0)

    a = f(x)                                   # a = fwd(x)
    if 0 < t <= 8:
        # Unrolled fori_loop: straight-line code with bounded vreg live ranges.
        a = jax.lax.fori_loop(0, t, lambda _, a_: f(x + a_), a, unroll=True)
    elif t > 8:
        a = jax.lax.fori_loop(0, t, lambda _, a_: f(x + a_), a)
    o_ref[...] = a


def _prep_inputs(x_nchw, w, g, be):
    """Wrapper-side layout plumbing (O(1) XLA ops; placement tensors are static)."""
    N, C, H, W = x_nchw.shape
    NW = N * W
    M = NW * C

    # NCHW -> (H, N*W*C): column index = n*(W*C) + w*C + c
    x2d = jnp.transpose(x_nchw, (2, 0, 3, 1)).reshape(H, M)

    # Static spatial placement tensor: e[kw, n*W + src_w, n*W + dst_w] = 1 when
    # src_w == dst_w + kw - 1 and 0 <= src_w < W (folds kw taps + width padding).
    e = np.zeros((3, NW, NW), np.float32)
    for kw in range(3):
        for n in range(N):
            for wo in range(W):
                src = wo + kw - 1
                if 0 <= src < W:
                    e[kw, n * W + src, n * W + wo] = 1.0

    # Stacked banded weight (kh taps stacked along the contraction axis):
    #   wb[kh*M + (nw_src*C + ci), nw_dst*C + co] = sum_kw e[kw,...] * w[kh,kw,ci,co]
    wb = jnp.einsum('kpq,hkio->hpiqo', jnp.asarray(e), w,
                    precision=jax.lax.Precision.HIGHEST).reshape(3 * M, M)
    wb = wb.astype(jnp.bfloat16)   # bf16 MXU operand; accumulate stays f32

    tile = lambda v: jnp.tile(v.reshape(1, C), (1, NW))     # (1, M), channel-tiled
    g_row, be_row = tile(g), tile(be)

    # Channel-grouping matrix pre-scaled by 1/(N*H*W): one dot yields mean & E[x^2].
    idx = np.arange(M)
    p = jnp.asarray((idx[:, None] % C == idx[None, :] % C).astype(np.float32)
                    / float(N * H * W))
    return x2d, wb, g_row, be_row, p


@functools.partial(jax.jit, static_argnames=("t",))
def rec_entity_forward(x_nchw, w, b, g, be, *, t):
    """RecEntity.forward: a = fwd(x); for i in range(t): a = fwd(x + a).

    `b` (conv bias) is accepted for API parity but not used: a constant
    per-channel bias before training-mode BatchNorm cancels exactly.
    """
    del b
    N, C, H, W = x_nchw.shape
    x2d, wb, g_row, be_row, p = _prep_inputs(x_nchw, w, g, be)

    vmem = pl.BlockSpec(memory_space=pltpu.MemorySpace.VMEM)
    kernel = functools.partial(_rec_kernel, int(t), BN_EPS)
    o2d = pl.pallas_call(
        kernel,
        out_shape=jax.ShapeDtypeStruct((H, N * W * C), jnp.float32),
        in_specs=[vmem] * 5,
        out_specs=vmem,
    )(x2d, wb, g_row, be_row, p)

    # (H, N*W*C) -> NCHW
    return jnp.transpose(o2d.reshape(H, N, W, C), (1, 3, 0, 2))


def init_params(key, out_channels, kernel_size=3):
    """Deterministic synthetic parameters (shapes match the PyTorch module)."""
    k_w, k_b, k_g, k_be = jax.random.split(key, 4)
    C, K = out_channels, kernel_size
    # conv weight stored as (kh, kw, cin, cout)
    w = jax.random.normal(k_w, (K, K, C, C), jnp.float32) * 0.1
    b = jax.random.normal(k_b, (1, C), jnp.float32) * 0.05
    gamma = 1.0 + 0.1 * jax.random.normal(k_g, (1, C), jnp.float32)
    beta = 0.05 * jax.random.normal(k_be, (1, C), jnp.float32)
    return w, b, gamma, beta


def _reference(x, w, b, g, be, t):
    """Pure-JAX reference (conv + bias + training-mode BN + ReLU recurrence)."""
    def f(z):
        y = jax.lax.conv_general_dilated(
            z, w, window_strides=(1, 1), padding=((1, 1), (1, 1)),
            dimension_numbers=("NCHW", "HWIO", "NCHW"),
            precision=jax.lax.Precision.HIGHEST)
        y = y + b.reshape(1, -1, 1, 1)
        mean = jnp.mean(y, axis=(0, 2, 3), keepdims=True)
        var = jnp.mean((y - mean) ** 2, axis=(0, 2, 3), keepdims=True)
        y = (y - mean) * jax.lax.rsqrt(var + BN_EPS)
        y = y * g.reshape(1, -1, 1, 1) + be.reshape(1, -1, 1, 1)
        return jnp.maximum(y, 0.0)

    a = f(x)
    for _ in range(t):
        a = f(x + a)
    return a


if __name__ == "__main__":
    # Small shapes consistent with the module: N=2, C=4, H=W=16, t=2
    N, C, H, W = 2, 4, 16, 16
    t = 2

    key = jax.random.PRNGKey(0)
    k_x, k_p = jax.random.split(key)
    x = jax.random.normal(k_x, (N, C, H, W), jnp.float32)
    w, b, gamma, beta = init_params(k_p, out_channels=C, kernel_size=3)

    out = rec_entity_forward(x, w, b, gamma, beta, t=t)
    out = jax.block_until_ready(out)

    assert out.shape == (N, C, H, W), out.shape
    assert bool(jnp.all(jnp.isfinite(out)))
    assert bool(jnp.all(out >= 0.0))  # ReLU output

    # Correctness check against a pure-JAX reference of the same forward pass
    # (reference keeps the conv bias; it cancels exactly under training-mode BN).
    ref = jax.block_until_ready(_reference(x, w, b, gamma, beta, t))
    assert bool(jnp.allclose(out, ref, atol=5e-2, rtol=5e-2)), (
        float(jnp.max(jnp.abs(out - ref))))

    # TODO(synk): BatchNorm2d running_mean / running_var buffer updates (training-time
    # side effect) are not reproduced; only the forward output is computed.
    print("KERNEL_OK")
</pallas_src>

<mosaic_0001>
module attributes {stable_mosaic.version = 11 : i64} {
  func.func @_rec_kernel(%arg0: memref<16x128xf32, #tpu.memory_space<vmem>>, %arg1: memref<384x128xbf16, #tpu.memory_space<vmem>>, %arg2: memref<1x128xf32, #tpu.memory_space<vmem>>, %arg3: memref<1x128xf32, #tpu.memory_space<vmem>>, %arg4: memref<128x128xf32, #tpu.memory_space<vmem>>, %arg5: memref<16x128xf32, #tpu.memory_space<vmem>>) attributes {dimension_semantics = [], scalar_prefetch = 0 : i64, scratch_operands = 0 : i64, tpu.core_type = #tpu.core_type<tc>} {
    %c0 = arith.constant 0 : index
    %c0_0 = arith.constant 0 : index
    %0 = vector.load %arg0[%c0, %c0_0] : memref<16x128xf32, #tpu.memory_space<vmem>>, vector<16x128xf32>
    %c0_1 = arith.constant 0 : index
    %c0_2 = arith.constant 0 : index
    %1 = vector.load %arg1[%c0_1, %c0_2] : memref<384x128xbf16, #tpu.memory_space<vmem>>, vector<384x128xbf16>
    %c0_3 = arith.constant 0 : index
    %c0_4 = arith.constant 0 : index
    %2 = vector.load %arg4[%c0_3, %c0_4] : memref<128x128xf32, #tpu.memory_space<vmem>>, vector<128x128xf32>
    %c0_5 = arith.constant 0 : index
    %c0_6 = arith.constant 0 : index
    %3 = vector.load %arg2[%c0_5, %c0_6] : memref<1x128xf32, #tpu.memory_space<vmem>>, vector<1x128xf32>
    %c0_7 = arith.constant 0 : index
    %c0_8 = arith.constant 0 : index
    %4 = vector.load %arg3[%c0_7, %c0_8] : memref<1x128xf32, #tpu.memory_space<vmem>>, vector<1x128xf32>
    %5 = tpu.iota {dimensions = array<i32: 0>} : vector<16x128xi32>
    %c0_i32 = arith.constant 0 : i32
    %6 = vector.broadcast %c0_i32 : i32 to vector<16x128xi32>
    %7 = arith.cmpi ne, %5, %6 : vector<16x128xi32>
    %c15_i32 = arith.constant 15 : i32
    %8 = vector.broadcast %c15_i32 : i32 to vector<16x128xi32>
    %9 = arith.cmpi ne, %5, %8 : vector<16x128xi32>
    %c1_i32 = arith.constant 1 : i32
    %10 = tpu.dynamic_rotate %0 by %c1_i32 dim 0 : vector<16x128xf32>, i32 -> vector<16x128xf32>
    %cst = arith.constant 0.000000e+00 : f32
    %11 = vector.broadcast %cst : f32 to vector<16x128xf32>
    %12 = arith.select %7, %10, %11 : vector<16x128xi1>, vector<16x128xf32>
    %c15_i32_9 = arith.constant 15 : i32
    %13 = tpu.dynamic_rotate %0 by %c15_i32_9 dim 0 : vector<16x128xf32>, i32 -> vector<16x128xf32>
    %cst_10 = arith.constant 0.000000e+00 : f32
    %14 = vector.broadcast %cst_10 : f32 to vector<16x128xf32>
    %15 = arith.select %9, %13, %14 : vector<16x128xi1>, vector<16x128xf32>
    %16 = tpu.concatenate %12, %0, %15 in 1 : vector<16x128xf32>, vector<16x128xf32>, vector<16x128xf32> -> vector<16x384xf32>
    %17 = arith.truncf %16 : vector<16x384xf32> to vector<16x384xbf16>
    %cst_11 = arith.constant dense<0.000000e+00> : vector<16x128xf32>
    %18 = tpu.matmul %17, %1, %cst_11 {dimension_numbers = #tpu.dot_dimension_numbers<[1], [0], [0], [1], [0, 0, 1, 1], [], []>} : vector<16x384xbf16>, vector<384x128xbf16>, vector<16x128xf32> -> vector<16x128xf32>
    %cst_12 = arith.constant dense<0.000000e+00> : vector<128xf32>
    %19 = vector.multi_reduction <add>, %18, %cst_12 [0] : vector<16x128xf32> to vector<128xf32>
    %20 = vector.shape_cast %19 : vector<128xf32> to vector<1x128xf32>
    %21 = arith.mulf %18, %18 : vector<16x128xf32>
    %cst_13 = arith.constant dense<0.000000e+00> : vector<128xf32>
    %22 = vector.multi_reduction <add>, %21, %cst_13 [0] : vector<16x128xf32> to vector<128xf32>
    %23 = vector.shape_cast %22 : vector<128xf32> to vector<1x128xf32>
    %24 = tpu.concatenate %20, %23 in 0 : vector<1x128xf32>, vector<1x128xf32> -> vector<2x128xf32>
    %cst_14 = arith.constant dense<0.000000e+00> : vector<2x128xf32>
    %25 = tpu.matmul %24, %2, %cst_14 {dimension_numbers = #tpu.dot_dimension_numbers<[1], [0], [0], [1], [0, 0, 1, 1], [], []>} : vector<2x128xf32>, vector<128x128xf32>, vector<2x128xf32> -> vector<2x128xf32>
    %26 = vector.extract_strided_slice %25 {offsets = [0, 0], sizes = [1, 128], strides = [1, 1]} : vector<2x128xf32> to vector<1x128xf32>
    %27 = vector.extract_strided_slice %25 {offsets = [1, 0], sizes = [1, 128], strides = [1, 1]} : vector<2x128xf32> to vector<1x128xf32>
    %28 = arith.mulf %26, %26 : vector<1x128xf32>
    %29 = arith.subf %27, %28 : vector<1x128xf32>
    %cst_15 = arith.constant 0.000000e+00 : f32
    %30 = vector.broadcast %cst_15 : f32 to vector<1x128xf32>
    %31 = arith.maximumf %29, %30 : vector<1x128xf32>
    %cst_16 = arith.constant 9.99999974E-6 : f32
    %32 = vector.broadcast %cst_16 : f32 to vector<1x128xf32>
    %33 = arith.addf %31, %32 : vector<1x128xf32>
    %34 = math.rsqrt %33 : vector<1x128xf32>
    %35 = arith.mulf %3, %34 : vector<1x128xf32>
    %36 = arith.mulf %26, %35 : vector<1x128xf32>
    %37 = arith.subf %4, %36 : vector<1x128xf32>
    %38 = vector.broadcast %35 : vector<1x128xf32> to vector<16x128xf32>
    %39 = arith.mulf %18, %38 : vector<16x128xf32>
    %40 = vector.broadcast %37 : vector<1x128xf32> to vector<16x128xf32>
    %41 = arith.addf %39, %40 : vector<16x128xf32>
    %cst_17 = arith.constant 0.000000e+00 : f32
    %42 = vector.broadcast %cst_17 : f32 to vector<16x128xf32>
    %43 = arith.maximumf %41, %42 : vector<16x128xf32>
    %c0_i32_18 = arith.constant 0 : i32
    %44 = arith.addf %0, %43 : vector<16x128xf32>
    %c1_i32_19 = arith.constant 1 : i32
    %45 = tpu.dynamic_rotate %44 by %c1_i32_19 dim 0 : vector<16x128xf32>, i32 -> vector<16x128xf32>
    %cst_20 = arith.constant 0.000000e+00 : f32
    %46 = vector.broadcast %cst_20 : f32 to vector<16x128xf32>
    %47 = arith.select %7, %45, %46 : vector<16x128xi1>, vector<16x128xf32>
    %c15_i32_21 = arith.constant 15 : i32
    %48 = tpu.dynamic_rotate %44 by %c15_i32_21 dim 0 : vector<16x128xf32>, i32 -> vector<16x128xf32>
    %cst_22 = arith.constant 0.000000e+00 : f32
    %49 = vector.broadcast %cst_22 : f32 to vector<16x128xf32>
    %50 = arith.select %9, %48, %49 : vector<16x128xi1>, vector<16x128xf32>
    %51 = tpu.concatenate %47, %44, %50 in 1 : vector<16x128xf32>, vector<16x128xf32>, vector<16x128xf32> -> vector<16x384xf32>
    %52 = arith.truncf %51 : vector<16x384xf32> to vector<16x384xbf16>
    %cst_23 = arith.constant dense<0.000000e+00> : vector<16x128xf32>
    %53 = tpu.matmul %52, %1, %cst_23 {dimension_numbers = #tpu.dot_dimension_numbers<[1], [0], [0], [1], [0, 0, 1, 1], [], []>} : vector<16x384xbf16>, vector<384x128xbf16>, vector<16x128xf32> -> vector<16x128xf32>
    %cst_24 = arith.constant dense<0.000000e+00> : vector<128xf32>
    %54 = vector.multi_reduction <add>, %53, %cst_24 [0] : vector<16x128xf32> to vector<128xf32>
    %55 = vector.shape_cast %54 : vector<128xf32> to vector<1x128xf32>
    %56 = arith.mulf %53, %53 : vector<16x128xf32>
    %cst_25 = arith.constant dense<0.000000e+00> : vector<128xf32>
    %57 = vector.multi_reduction <add>, %56, %cst_25 [0] : vector<16x128xf32> to vector<128xf32>
    %58 = vector.shape_cast %57 : vector<128xf32> to vector<1x128xf32>
    %59 = tpu.concatenate %55, %58 in 0 : vector<1x128xf32>, vector<1x128xf32> -> vector<2x128xf32>
    %cst_26 = arith.constant dense<0.000000e+00> : vector<2x128xf32>
    %60 = tpu.matmul %59, %2, %cst_26 {dimension_numbers = #tpu.dot_dimension_numbers<[1], [0], [0], [1], [0, 0, 1, 1], [], []>} : vector<2x128xf32>, vector<128x128xf32>, vector<2x128xf32> -> vector<2x128xf32>
    %61 = vector.extract_strided_slice %60 {offsets = [0, 0], sizes = [1, 128], strides = [1, 1]} : vector<2x128xf32> to vector<1x128xf32>
    %62 = vector.extract_strided_slice %60 {offsets = [1, 0], sizes = [1, 128], strides = [1, 1]} : vector<2x128xf32> to vector<1x128xf32>
    %63 = arith.mulf %61, %61 : vector<1x128xf32>
    %64 = arith.subf %62, %63 : vector<1x128xf32>
    %cst_27 = arith.constant 0.000000e+00 : f32
    %65 = vector.broadcast %cst_27 : f32 to vector<1x128xf32>
    %66 = arith.maximumf %64, %65 : vector<1x128xf32>
    %cst_28 = arith.constant 9.99999974E-6 : f32
    %67 = vector.broadcast %cst_28 : f32 to vector<1x128xf32>
    %68 = arith.addf %66, %67 : vector<1x128xf32>
    %69 = math.rsqrt %68 : vector<1x128xf32>
    %70 = arith.mulf %3, %69 : vector<1x128xf32>
    %71 = arith.mulf %61, %70 : vector<1x128xf32>
    %72 = arith.subf %4, %71 : vector<1x128xf32>
    %73 = vector.broadcast %70 : vector<1x128xf32> to vector<16x128xf32>
    %74 = arith.mulf %53, %73 : vector<16x128xf32>
    %75 = vector.broadcast %72 : vector<1x128xf32> to vector<16x128xf32>
    %76 = arith.addf %74, %75 : vector<16x128xf32>
    %cst_29 = arith.constant 0.000000e+00 : f32
    %77 = vector.broadcast %cst_29 : f32 to vector<16x128xf32>
    %78 = arith.maximumf %76, %77 : vector<16x128xf32>
    %c1_i32_30 = arith.constant 1 : i32
    %79 = arith.addf %0, %78 : vector<16x128xf32>
    %c1_i32_31 = arith.constant 1 : i32
    %80 = tpu.dynamic_rotate %79 by %c1_i32_31 dim 0 : vector<16x128xf32>, i32 -> vector<16x128xf32>
    %cst_32 = arith.constant 0.000000e+00 : f32
    %81 = vector.broadcast %cst_32 : f32 to vector<16x128xf32>
    %82 = arith.select %7, %80, %81 : vector<16x128xi1>, vector<16x128xf32>
    %c15_i32_33 = arith.constant 15 : i32
    %83 = tpu.dynamic_rotate %79 by %c15_i32_33 dim 0 : vector<16x128xf32>, i32 -> vector<16x128xf32>
    %cst_34 = arith.constant 0.000000e+00 : f32
    %84 = vector.broadcast %cst_34 : f32 to vector<16x128xf32>
    %85 = arith.select %9, %83, %84 : vector<16x128xi1>, vector<16x128xf32>
    %86 = tpu.concatenate %82, %79, %85 in 1 : vector<16x128xf32>, vector<16x128xf32>, vector<16x128xf32> -> vector<16x384xf32>
    %87 = arith.truncf %86 : vector<16x384xf32> to vector<16x384xbf16>
    %cst_35 = arith.constant dense<0.000000e+00> : vector<16x128xf32>
    %88 = tpu.matmul %87, %1, %cst_35 {dimension_numbers = #tpu.dot_dimension_numbers<[1], [0], [0], [1], [0, 0, 1, 1], [], []>} : vector<16x384xbf16>, vector<384x128xbf16>, vector<16x128xf32> -> vector<16x128xf32>
    %cst_36 = arith.constant dense<0.000000e+00> : vector<128xf32>
    %89 = vector.multi_reduction <add>, %88, %cst_36 [0] : vector<16x128xf32> to vector<128xf32>
    %90 = vector.shape_cast %89 : vector<128xf32> to vector<1x128xf32>
    %91 = arith.mulf %88, %88 : vector<16x128xf32>
    %cst_37 = arith.constant dense<0.000000e+00> : vector<128xf32>
    %92 = vector.multi_reduction <add>, %91, %cst_37 [0] : vector<16x128xf32> to vector<128xf32>
    %93 = vector.shape_cast %92 : vector<128xf32> to vector<1x128xf32>
    %94 = tpu.concatenate %90, %93 in 0 : vector<1x128xf32>, vector<1x128xf32> -> vector<2x128xf32>
    %cst_38 = arith.constant dense<0.000000e+00> : vector<2x128xf32>
    %95 = tpu.matmul %94, %2, %cst_38 {dimension_numbers = #tpu.dot_dimension_numbers<[1], [0], [0], [1], [0, 0, 1, 1], [], []>} : vector<2x128xf32>, vector<128x128xf32>, vector<2x128xf32> -> vector<2x128xf32>
    %96 = vector.extract_strided_slice %95 {offsets = [0, 0], sizes = [1, 128], strides = [1, 1]} : vector<2x128xf32> to vector<1x128xf32>
    %97 = vector.extract_strided_slice %95 {offsets = [1, 0], sizes = [1, 128], strides = [1, 1]} : vector<2x128xf32> to vector<1x128xf32>
    %98 = arith.mulf %96, %96 : vector<1x128xf32>
    %99 = arith.subf %97, %98 : vector<1x128xf32>
    %cst_39 = arith.constant 0.000000e+00 : f32
    %100 = vector.broadcast %cst_39 : f32 to vector<1x128xf32>
    %101 = arith.maximumf %99, %100 : vector<1x128xf32>
    %cst_40 = arith.constant 9.99999974E-6 : f32
    %102 = vector.broadcast %cst_40 : f32 to vector<1x128xf32>
    %103 = arith.addf %101, %102 : vector<1x128xf32>
    %104 = math.rsqrt %103 : vector<1x128xf32>
    %105 = arith.mulf %3, %104 : vector<1x128xf32>
    %106 = arith.mulf %96, %105 : vector<1x128xf32>
    %107 = arith.subf %4, %106 : vector<1x128xf32>
    %108 = vector.broadcast %105 : vector<1x128xf32> to vector<16x128xf32>
    %109 = arith.mulf %88, %108 : vector<16x128xf32>
    %110 = vector.broadcast %107 : vector<1x128xf32> to vector<16x128xf32>
    %111 = arith.addf %109, %110 : vector<16x128xf32>
    %cst_41 = arith.constant 0.000000e+00 : f32
    %112 = vector.broadcast %cst_41 : f32 to vector<16x128xf32>
    %113 = arith.maximumf %111, %112 : vector<16x128xf32>
    %c0_42 = arith.constant 0 : index
    %c0_43 = arith.constant 0 : index
    %114 = vector.load %arg5[%c0_42, %c0_43] : memref<16x128xf32, #tpu.memory_space<vmem>>, vector<16x128xf32>
    tpu.vector_store %arg5[%c0_42, %c0_43], %113 {strides = array<i32>} : memref<16x128xf32, #tpu.memory_space<vmem>>, vector<16x128xf32>,
    return
  }
}

</mosaic_0001>

<llo_original>
// kernel: rec_entity_forward.1
$region0: #{rec_entity_forward.1}
  #allocation0 [shape = 'u32[]', space=smem, size = 0x4, offset = 0x4, fixed_abs, tag = 'smem constant byte address 0x4 - core index']
  #allocation1 [shape = 'u32[72,128]{1,0:T(1,128)}', space=vmem, size = 0x9000, scoped, tag = 'internal scratch']
  %s0 = inlined_call_operand.vmem [shape: f32[16,128], index: 0, kind: input, shape index: {}]
  %s1 = inlined_call_operand.vmem [shape: bf16[384,128], index: 1, kind: input, shape index: {}]
  %s2 = inlined_call_operand.vmem [shape: f32[1,128], index: 2, kind: input, shape index: {}]
  %s3 = inlined_call_operand.vmem [shape: f32[1,128], index: 3, kind: input, shape index: {}]
  %s4 = inlined_call_operand.vmem [shape: f32[128,128], index: 4, kind: input, shape index: {}]
  %s5 = inlined_call_operand.vmem [shape: f32[16,128], index: 5, kind: output, shape index: {}]
  %s6 = sld [smem:[#allocation0]]
  $region30: #{rec_entity_forward.1} parent=0
    _
  %s8 = ssub.s32 1, %s6
  %s9 = scalar_select 0, %s8, %s6
  // Predicated region
  $region2: #{rec_entity_forward.1} parent=0 // pred_check
    _
  $region3: #{rec_entity_forward.1} parent=0 // pred_check_branch
    %11 = sbr.rel (0) target = $region5
  $region4: #{rec_entity_forward.1} parent=0 // pred_region
    _
  $region5: #{rec_entity_forward.1} parent=0 // pred_fallthru
    _
  // Predicated region
  $region6: #{rec_entity_forward.1} parent=0 // pred_check
    _
  $region7: #{rec_entity_forward.1} parent=0 // pred_check_branch
    %13 = sbr.rel (0) target = $region9
  $region8: #{rec_entity_forward.1} parent=0 // pred_region
    _
  $region9: #{rec_entity_forward.1} parent=0 // pred_fallthru
    _
  // Predicated region
  $region10: #{rec_entity_forward.1} parent=0 // pred_check
    _
  $region11: #{rec_entity_forward.1} parent=0 // pred_check_branch
    %15 = sbr.rel (0) target = $region13
  $region12: #{rec_entity_forward.1} parent=0 // pred_region
    _
  $region13: #{rec_entity_forward.1} parent=0 // pred_fallthru
    _
  // Predicated region
  $region14: #{rec_entity_forward.1} parent=0 // pred_check
    _
  $region15: #{rec_entity_forward.1} parent=0 // pred_check_branch
    %17 = sbr.rel (0) target = $region17
  $region16: #{rec_entity_forward.1} parent=0 // pred_region
    _
  $region17: #{rec_entity_forward.1} parent=0 // pred_fallthru
    _
  // Predicated region
  $region18: #{rec_entity_forward.1} parent=0 // pred_check
    _
  $region19: #{rec_entity_forward.1} parent=0 // pred_check_branch
    %19 = sbr.rel (0) target = $region21
  $region20: #{rec_entity_forward.1} parent=0 // pred_region
    _
  $region21: #{rec_entity_forward.1} parent=0 // pred_fallthru
    _
  %v20 = vld [vmem:[%s0] sm:$0xff]
  %v21 = vld [vmem:[%s0 + $0x8] sm:$0xff]
  %v22 = vld [vmem:[%s1] sm:$0xf]
  %v23 = vld [vmem:[%s1 + $0x4] sm:$0xf]
  %v24 = vld [vmem:[%s1 + $0x8] sm:$0xf]
  %v25 = vld [vmem:[%s1 + $0xc] sm:$0xf]
  %v26 = vld [vmem:[%s1 + $0x10] sm:$0xf]
  %v27 = vld [vmem:[%s1 + $0x14] sm:$0xf]
  %v28 = vld [vmem:[%s1 + $0x18] sm:$0xf]
  %v29 = vld [vmem:[%s1 + $0x1c] sm:$0xf]
  %v30 = vld [vmem:[%s1 + $0x20] sm:$0xf]
  %v31 = vld [vmem:[%s1 + $0x24] sm:$0xf]
  %v32 = vld [vmem:[%s1 + $0x28] sm:$0xf]
  %v33 = vld [vmem:[%s1 + $0x2c] sm:$0xf]
  %v34 = vld [vmem:[%s1 + $0x30] sm:$0xf]
  %v35 = vld [vmem:[%s1 + $0x34] sm:$0xf]
  %v36 = vld [vmem:[%s1 + $0x38] sm:$0xf]
  %v37 = vld [vmem:[%s1 + $0x3c] sm:$0xf]
  %v38 = vld [vmem:[%s1 + $0x40] sm:$0xf]
  %v39 = vld [vmem:[%s1 + $0x44] sm:$0xf]
  %v40 = vld [vmem:[%s1 + $0x48] sm:$0xf]
  %v41 = vld [vmem:[%s1 + $0x4c] sm:$0xf]
  %v42 = vld [vmem:[%s1 + $0x50] sm:$0xf]
  %v43 = vld [vmem:[%s1 + $0x54] sm:$0xf]
  %v44 = vld [vmem:[%s1 + $0x58] sm:$0xf]
  %v45 = vld [vmem:[%s1 + $0x5c] sm:$0xf]
  %v46 = vld [vmem:[%s1 + $0x60] sm:$0xf]
  %v47 = vld [vmem:[%s1 + $0x64] sm:$0xf]
  %v48 = vld [vmem:[%s1 + $0x68] sm:$0xf]
  %v49 = vld [vmem:[%s1 + $0x6c] sm:$0xf]
  %v50 = vld [vmem:[%s1 + $0x70] sm:$0xf]
  %v51 = vld [vmem:[%s1 + $0x74] sm:$0xf]
  %v52 = vld [vmem:[%s1 + $0x78] sm:$0xf]
  %v53 = vld [vmem:[%s1 + $0x7c] sm:$0xf]
  %v54 = vld [vmem:[%s1 + $0x80] sm:$0xf]
  %v55 = vld [vmem:[%s1 + $0x84] sm:$0xf]
  %v56 = vld [vmem:[%s1 + $0x88] sm:$0xf]
  %v57 = vld [vmem:[%s1 + $0x8c] sm:$0xf]
  %v58 = vld [vmem:[%s1 + $0x90] sm:$0xf]
  %v59 = vld [vmem:[%s1 + $0x94] sm:$0xf]
  %v60 = vld [vmem:[%s1 + $0x98] sm:$0xf]
  %v61 = vld [vmem:[%s1 + $0x9c] sm:$0xf]
  %v62 = vld [vmem:[%s1 + $0xa0] sm:$0xf]
  %v63 = vld [vmem:[%s1 + $0xa4] sm:$0xf]
  %v64 = vld [vmem:[%s1 + $0xa8] sm:$0xf]
  %v65 = vld [vmem:[%s1 + $0xac] sm:$0xf]
  %v66 = vld [vmem:[%s1 + $0xb0] sm:$0xf]
  %v67 = vld [vmem:[%s1 + $0xb4] sm:$0xf]
  %v68 = vld [vmem:[%s1 + $0xb8] sm:$0xf]
  %v69 = vld [vmem:[%s1 + $0xbc] sm:$0xf]
  %v70 = vld [vmem:[%s4] sm:$0xff]
  %v71 = vld [vmem:[%s4 + $0x8] sm:$0xff]
  %v72 = vld [vmem:[%s4 + $0x10] sm:$0xff]
  %v73 = vld [vmem:[%s4 + $0x18] sm:$0xff]
  %v74 = vld [vmem:[%s4 + $0x20] sm:$0xff]
  %v75 = vld [vmem:[%s4 + $0x28] sm:$0xff]
  %v76 = vld [vmem:[%s4 + $0x30] sm:$0xff]
  %v77 = vld [vmem:[%s4 + $0x38] sm:$0xff]
  %v78 = vld [vmem:[%s4 + $0x40] sm:$0xff]
  %v79 = vld [vmem:[%s4 + $0x48] sm:$0xff]
  %v80 = vld [vmem:[%s4 + $0x50] sm:$0xff]
  %v81 = vld [vmem:[%s4 + $0x58] sm:$0xff]
  %v82 = vld [vmem:[%s4 + $0x60] sm:$0xff]
  %v83 = vld [vmem:[%s4 + $0x68] sm:$0xff]
  %v84 = vld [vmem:[%s4 + $0x70] sm:$0xff]
  %v85 = vld [vmem:[%s4 + $0x78] sm:$0xff]
  %v86 = vld [vmem:[%s2] sm:$0x1]
  %v87 = vld [vmem:[%s3] sm:$0x1]
  %v88 = vlaneseq
  %v89 = vshrl.u32 %v88, 7
  %v90 = vadd.s32 %v89, 8
  %vm91 = vcmp.ne.s32.totalorder %v89, 0
  %vm92 = vcmp.ne.s32.totalorder %v90, 0
  %vm93 = vcmp.ne.s32.totalorder %v89, 15
  %vm94 = vcmp.ne.s32.totalorder %v90, 15
  %v95 = vrot.slane %v20, 7
  %v96 = vrot.slane %v21, 7
  %vm97 = vcmp.lt.s32.totalorder %v89, 1
  %v98 = vsel %vm97, %v95, %v96
  %v99 = vsel %vm97, %v96, %v95
  %v100 = vsel %vm91, %v99, 0.0
  %v101 = vsel %vm92, %v98, 0.0
  %v102 = vrot.slane %v20, 1
  %v103 = vrot.slane %v21, 1
  %vm104 = vcmp.lt.s32.totalorder %v89, 7
  %v105 = vsel %vm104, %v102, %v103
  %v106 = vsel %vm104, %v103, %v102
  %v107 = vsel %vm93, %v105, 0.0
  %v108 = vsel %vm94, %v106, 0.0
  %v109 = vpack.c.bf16 %v101, %v100
  %v110 = vpack.c.bf16 %v21, %v20
  %v111 = vpack.c.bf16 %v108, %v107
  %v160 = vunpack.c.l.b16 %v22
  %v161 = vunpack.c.l.b16 %v23
  %v162 = vunpack.c.l.b16 %v24
  %v163 = vunpack.c.l.b16 %v25
  %v164 = vunpack.c.l.b16 %v26
  %v165 = vunpack.c.l.b16 %v27
  %v166 = vunpack.c.l.b16 %v28
  %v167 = vunpack.c.l.b16 %v29
  %v168 = vunpack.c.l.b16 %v30
  %v169 = vunpack.c.l.b16 %v31
  %v170 = vunpack.c.l.b16 %v32
  %v171 = vunpack.c.l.b16 %v33
  %v172 = vunpack.c.l.b16 %v34
  %v173 = vunpack.c.l.b16 %v35
  %v174 = vunpack.c.l.b16 %v36
  %v175 = vunpack.c.l.b16 %v37
  %v176 = vunpack.c.l.b16 %v38
  %v177 = vunpack.c.l.b16 %v39
  %v178 = vunpack.c.l.b16 %v40
  %v179 = vunpack.c.l.b16 %v41
  %v180 = vunpack.c.l.b16 %v42
  %v181 = vunpack.c.l.b16 %v43
  %v182 = vunpack.c.l.b16 %v44
  %v183 = vunpack.c.l.b16 %v45
  %v184 = vunpack.c.l.b16 %v46
  %v185 = vunpack.c.l.b16 %v47
  %v186 = vunpack.c.l.b16 %v48
  %v187 = vunpack.c.l.b16 %v49
  %v188 = vunpack.c.l.b16 %v50
  %v189 = vunpack.c.l.b16 %v51
  %v190 = vunpack.c.l.b16 %v52
  %v191 = vunpack.c.l.b16 %v53
  %v192 = vunpack.c.l.b16 %v54
  %v193 = vunpack.c.l.b16 %v55
  %v194 = vunpack.c.l.b16 %v56
  %v195 = vunpack.c.l.b16 %v57
  %v196 = vunpack.c.l.b16 %v58
  %v197 = vunpack.c.l.b16 %v59
  %v198 = vunpack.c.l.b16 %v60
  %v199 = vunpack.c.l.b16 %v61
  %v200 = vunpack.c.l.b16 %v62
  %v201 = vunpack.c.l.b16 %v63
  %v202 = vunpack.c.l.b16 %v64
  %v203 = vunpack.c.l.b16 %v65
  %v204 = vunpack.c.l.b16 %v66
  %v205 = vunpack.c.l.b16 %v67
  %v206 = vunpack.c.l.b16 %v68
  %v207 = vunpack.c.l.b16 %v69
  %v208 = vpack.c.b16 %v161, %v160
  %v209 = vpack.c.b16 %v163, %v162
  %v210 = vpack.c.b16 %v165, %v164
  %v211 = vpack.c.b16 %v167, %v166
  %v212 = vpack.c.b16 %v169, %v168
  %v213 = vpack.c.b16 %v171, %v170
  %v214 = vpack.c.b16 %v173, %v172
  %v215 = vpack.c.b16 %v175, %v174
  %v216 = vpack.c.b16 %v177, %v176
  %v217 = vpack.c.b16 %v179, %v178
  %v218 = vpack.c.b16 %v181, %v180
  %v219 = vpack.c.b16 %v183, %v182
  %v220 = vpack.c.b16 %v185, %v184
  %v221 = vpack.c.b16 %v187, %v186
  %v222 = vpack.c.b16 %v189, %v188
  %v223 = vpack.c.b16 %v191, %v190
  %v224 = vpack.c.b16 %v193, %v192
  %v225 = vpack.c.b16 %v195, %v194
  %v226 = vpack.c.b16 %v197, %v196
  %v227 = vpack.c.b16 %v199, %v198
  %v228 = vpack.c.b16 %v201, %v200
  %v229 = vpack.c.b16 %v203, %v202
  %v230 = vpack.c.b16 %v205, %v204
  %v231 = vpack.c.b16 %v207, %v206
  %256 = vmatpush.bf16.msra.mxu0 %v215
  %257 = vmatpush.bf16.msra.mxu0 %v214
  %258 = vmatpush.bf16.msra.mxu0 %v213
  %259 = vmatpush.bf16.msra.mxu0 %v212
  %260 = vmatpush.bf16.msra.mxu0 %v211
  %261 = vmatpush.bf16.msra.mxu0 %v210
  %262 = vmatpush.bf16.msra.mxu0 %v209
  %263 = vmatpush.bf16.msra.mxu0 %v208
  %264 = vmatmul.bf16.gmra.mxu0 %v109
  %v265 = vpop.f32.mrf.mxu0
  %v266 = vadd.f32 0.0, %v265
  %v267 = vpop.f32.mrf.mxu0
  %v268 = vadd.f32 0.0, %v267
  %269 = vdwg.mxu0
  %270 = vmatpush.bf16.msra.mxu0 %v223
  %271 = vmatpush.bf16.msra.mxu0 %v222
  %272 = vmatpush.bf16.msra.mxu0 %v221
  %273 = vmatpush.bf16.msra.mxu0 %v220
  %274 = vmatpush.bf16.msra.mxu0 %v219
  %275 = vmatpush.bf16.msra.mxu0 %v218
  %276 = vmatpush.bf16.msra.mxu0 %v217
  %277 = vmatpush.bf16.msra.mxu0 %v216
  %278 = vmatmul.bf16.gmra.mxu0 %v110
  %v279 = vpop.f32.mrf.mxu0
  %v280 = vadd.f32 %v266, %v279
  %v281 = vpop.f32.mrf.mxu0
  %v282 = vadd.f32 %v268, %v281
  %283 = vdwg.mxu0
  %284 = vmatpush.bf16.msra.mxu0 %v231
  %285 = vmatpush.bf16.msra.mxu0 %v230
  %286 = vmatpush.bf16.msra.mxu0 %v229
  %287 = vmatpush.bf16.msra.mxu0 %v228
  %288 = vmatpush.bf16.msra.mxu0 %v227
  %289 = vmatpush.bf16.msra.mxu0 %v226
  %290 = vmatpush.bf16.msra.mxu0 %v225
  %291 = vmatpush.bf16.msra.mxu0 %v224
  %292 = vmatmul.bf16.gmra.mxu0 %v111
  %v293 = vpop.f32.mrf.mxu0
  %v294 = vadd.f32 %v280, %v293
  %v295 = vpop.f32.mrf.mxu0
  %v296 = vadd.f32 %v282, %v295
  %297 = vdwg.mxu0
  %v298 = vadd.f32 %v294, %v296
  %v299 = vrot.slane %v298, 4
  %v300 = vadd.f32 %v298, %v299
  %v301 = vrot.slane %v300, 2
  %v302 = vadd.f32 %v300, %v301
  %v303 = vrot.slane %v302, 1
  %v304 = vadd.f32 %v302, %v303
  %v305 = vmul.f32 %v294, %v294
  %v306 = vmul.f32 %v296, %v296
  %v307 = vadd.f32 %v305, %v306
  %v308 = vrot.slane %v307, 4
  %v309 = vadd.f32 %v307, %v308
  %v310 = vrot.slane %v309, 2
  %v311 = vadd.f32 %v309, %v310
  %v312 = vrot.slane %v311, 1
  %v313 = vadd.f32 %v311, %v312
  %vm314 = vcmask 1040384
  %v315 = vsel %vm314, %v304, %v313
  %316 = vmatpush.msra.mxu0 %v85
  %317 = vmatpush.msra.mxu0 %v84
  %318 = vmatpush.msra.mxu0 %v83
  %319 = vmatpush.msra.mxu0 %v82
  %320 = vmatpush.msra.mxu0 %v81
  %321 = vmatpush.msra.mxu0 %v80
  %322 = vmatpush.msra.mxu0 %v79
  %323 = vmatpush.msra.mxu0 %v78
  %324 = vmatpush.msra.mxu0 %v77
  %325 = vmatpush.msra.mxu0 %v76
  %326 = vmatpush.msra.mxu0 %v75
  %327 = vmatpush.msra.mxu0 %v74
  %328 = vmatpush.msra.mxu0 %v73
  %329 = vmatpush.msra.mxu0 %v72
  %330 = vmatpush.msra.mxu0 %v71
  %331 = vmatpush.msra.mxu0 %v70
  %332 = vmatmul.f32.gmra.mxu0 %v315
  %v333 = vpop.f32.mrf.mxu0
  %v334 = vadd.f32 0.0, %v333
  %335 = vdwg.mxu0
  %v336 = vmul.f32 %v334, %v334
  %v338 = vrot.slane %v336, 7
  %v340 = vsub.f32 %v334, %v338
  %v341 = vmax.f32 %v340, 0.0
  %v342 = vadd.f32 %v341, 1e-05
  %v343 = vrsqrt.pop %v342
  %v344 = vmul.f32 %v343, %v342
  %v345 = vmul.f32 %v344, %v343
  %v346 = vmul.f32 0.5, %v345
  %v347 = vsub.f32 1.5, %v346
  %v348 = vmul.f32 %v343, %v347
  %vm349 = vweird.f32 %v342
  %vm350 = vweird.f32 %v343
  %vm351 = vmor %vm349, %vm350
  %v352 = vsel %vm351, %v343, %v348
  %354 = vst [vmem:[#allocation1] sm:$0xff] %v352
  %s355 = scalar_lea.vmem [#allocation1], 1
  %v356 = vld [vmem:[%s355] ss:$9 sm:$0xff]
  %v358 = vmul.f32 %v86, %v356
  %v359 = vmul.f32 %v334, %v358
  %v360 = vsub.f32 %v87, %v359
  %v362 = vperm.slane %v358, 0
  %v364 = vmul.f32 %v294, %v362
  %v365 = vmul.f32 %v296, %v362
  %v367 = vperm.slane %v360, 0
  %v369 = vadd.f32 %v364, %v367
  %v370 = vadd.f32 %v365, %v367
  %v371 = vmax.f32 %v369, 0.0
  %v372 = vmax.f32 %v370, 0.0
  %v373 = vadd.f32 %v20, %v371
  %v374 = vadd.f32 %v21, %v372
  %v375 = vrot.slane %v373, 7
  %v376 = vrot.slane %v374, 7
  %v377 = vsel %vm97, %v375, %v376
  %v378 = vsel %vm97, %v376, %v375
  %v379 = vsel %vm91, %v378, 0.0
  %v380 = vsel %vm92, %v377, 0.0
  %v381 = vrot.slane %v373, 1
  %v382 = vrot.slane %v374, 1
  %v383 = vsel %vm104, %v381, %v382
  %v384 = vsel %vm104, %v382, %v381
  %v385 = vsel %vm93, %v383, 0.0
  %v386 = vsel %vm94, %v384, 0.0
  %v387 = vpack.c.bf16 %v380, %v379
  %v388 = vpack.c.bf16 %v374, %v373
  %v389 = vpack.c.bf16 %v386, %v385
  %390 = vmatpush.bf16.msra.mxu0 %v215
  %391 = vmatpush.bf16.msra.mxu0 %v214
  %392 = vmatpush.bf16.msra.mxu0 %v213
  %393 = vmatpush.bf16.msra.mxu0 %v212
  %394 = vmatpush.bf16.msra.mxu0 %v211
  %395 = vmatpush.bf16.msra.mxu0 %v210
  %396 = vmatpush.bf16.msra.mxu0 %v209
  %397 = vmatpush.bf16.msra.mxu0 %v208
  %398 = vmatmul.bf16.gmra.mxu0 %v387
  %v399 = vpop.f32.mrf.mxu0
  %v400 = vadd.f32 0.0, %v399
  %v401 = vpop.f32.mrf.mxu0
  %v402 = vadd.f32 0.0, %v401
  %403 = vdwg.mxu0
  %404 = vmatpush.bf16.msra.mxu0 %v223
  %405 = vmatpush.bf16.msra.mxu0 %v222
  %406 = vmatpush.bf16.msra.mxu0 %v221
  %407 = vmatpush.bf16.msra.mxu0 %v220
  %408 = vmatpush.bf16.msra.mxu0 %v219
  %409 = vmatpush.bf16.msra.mxu0 %v218
  %410 = vmatpush.bf16.msra.mxu0 %v217
  %411 = vmatpush.bf16.msra.mxu0 %v216
  %412 = vmatmul.bf16.gmra.mxu0 %v388
  %v413 = vpop.f32.mrf.mxu0
  %v414 = vadd.f32 %v400, %v413
  %v415 = vpop.f32.mrf.mxu0
  %v416 = vadd.f32 %v402, %v415
  %417 = vdwg.mxu0
  %418 = vmatpush.bf16.msra.mxu0 %v231
  %419 = vmatpush.bf16.msra.mxu0 %v230
  %420 = vmatpush.bf16.msra.mxu0 %v229
  %421 = vmatpush.bf16.msra.mxu0 %v228
  %422 = vmatpush.bf16.msra.mxu0 %v227
  %423 = vmatpush.bf16.msra.mxu0 %v226
  %424 = vmatpush.bf16.msra.mxu0 %v225
  %425 = vmatpush.bf16.msra.mxu0 %v224
  %426 = vmatmul.bf16.gmra.mxu0 %v389
  %v427 = vpop.f32.mrf.mxu0
  %v428 = vadd.f32 %v414, %v427
  %v429 = vpop.f32.mrf.mxu0
  %v430 = vadd.f32 %v416, %v429
  %431 = vdwg.mxu0
  %v432 = vadd.f32 %v428, %v430
  %v433 = vrot.slane %v432, 4
  %v434 = vadd.f32 %v432, %v433
  %v435 = vrot.slane %v434, 2
  %v436 = vadd.f32 %v434, %v435
  %v437 = vrot.slane %v436, 1
  %v438 = vadd.f32 %v436, %v437
  %v439 = vmul.f32 %v428, %v428
  %v440 = vmul.f32 %v430, %v430
  %v441 = vadd.f32 %v439, %v440
  %v442 = vrot.slane %v441, 4
  %v443 = vadd.f32 %v441, %v442
  %v444 = vrot.slane %v443, 2
  %v445 = vadd.f32 %v443, %v444
  %v446 = vrot.slane %v445, 1
  %v447 = vadd.f32 %v445, %v446
  %v448 = vsel %vm314, %v438, %v447
  %449 = vmatpush.msra.mxu0 %v85
  %450 = vmatpush.msra.mxu0 %v84
  %451 = vmatpush.msra.mxu0 %v83
  %452 = vmatpush.msra.mxu0 %v82
  %453 = vmatpush.msra.mxu0 %v81
  %454 = vmatpush.msra.mxu0 %v80
  %455 = vmatpush.msra.mxu0 %v79
  %456 = vmatpush.msra.mxu0 %v78
  %457 = vmatpush.msra.mxu0 %v77
  %458 = vmatpush.msra.mxu0 %v76
  %459 = vmatpush.msra.mxu0 %v75
  %460 = vmatpush.msra.mxu0 %v74
  %461 = vmatpush.msra.mxu0 %v73
  %462 = vmatpush.msra.mxu0 %v72
  %463 = vmatpush.msra.mxu0 %v71
  %464 = vmatpush.msra.mxu0 %v70
  %465 = vmatmul.f32.gmra.mxu0 %v448
  %v466 = vpop.f32.mrf.mxu0
  %v467 = vadd.f32 0.0, %v466
  %468 = vdwg.mxu0
  %v469 = vmul.f32 %v467, %v467
  %v471 = vrot.slane %v469, 7
  %v473 = vsub.f32 %v467, %v471
  %v474 = vmax.f32 %v473, 0.0
  %v475 = vadd.f32 %v474, 1e-05
  %v476 = vrsqrt.pop %v475
  %v477 = vmul.f32 %v476, %v475
  %v478 = vmul.f32 %v477, %v476
  %v479 = vmul.f32 0.5, %v478
  %v480 = vsub.f32 1.5, %v479
  %v481 = vmul.f32 %v476, %v480
  %vm482 = vweird.f32 %v475
  %vm483 = vweird.f32 %v476
  %vm484 = vmor %vm482, %vm483
  %v485 = vsel %vm484, %v476, %v481
  %487 = vst [vmem:[#allocation1] sm:$0xff] %v485
  %s488 = scalar_lea.vmem [#allocation1], 1
  %v489 = vld [vmem:[%s488] ss:$9 sm:$0xff]
  %v491 = vmul.f32 %v86, %v489
  %v492 = vmul.f32 %v467, %v491
  %v493 = vsub.f32 %v87, %v492
  %v495 = vperm.slane %v491, 0
  %v497 = vmul.f32 %v428, %v495
  %v498 = vmul.f32 %v430, %v495
  %v500 = vperm.slane %v493, 0
  %v502 = vadd.f32 %v497, %v500
  %v503 = vadd.f32 %v498, %v500
  %v504 = vmax.f32 %v502, 0.0
  %v505 = vmax.f32 %v503, 0.0
  %v506 = vadd.f32 %v20, %v504
  %v507 = vadd.f32 %v21, %v505
  %v508 = vrot.slane %v506, 7
  %v509 = vrot.slane %v507, 7
  %v510 = vsel %vm97, %v508, %v509
  %v511 = vsel %vm97, %v509, %v508
  %v512 = vsel %vm91, %v511, 0.0
  %v513 = vsel %vm92, %v510, 0.0
  %v514 = vrot.slane %v506, 1
  %v515 = vrot.slane %v507, 1
  %v516 = vsel %vm104, %v514, %v515
  %v517 = vsel %vm104, %v515, %v514
  %v518 = vsel %vm93, %v516, 0.0
  %v519 = vsel %vm94, %v517, 0.0
  %v520 = vpack.c.bf16 %v513, %v512
  %v521 = vpack.c.bf16 %v507, %v506
  %v522 = vpack.c.bf16 %v519, %v518
  %523 = vmatpush.bf16.msra.mxu0 %v215
  %524 = vmatpush.bf16.msra.mxu0 %v214
  %525 = vmatpush.bf16.msra.mxu0 %v213
  %526 = vmatpush.bf16.msra.mxu0 %v212
  %527 = vmatpush.bf16.msra.mxu0 %v211
  %528 = vmatpush.bf16.msra.mxu0 %v210
  %529 = vmatpush.bf16.msra.mxu0 %v209
  %530 = vmatpush.bf16.msra.mxu0 %v208
  %531 = vmatmul.bf16.gmra.mxu0 %v520
  %v532 = vpop.f32.mrf.mxu0
  %v533 = vadd.f32 0.0, %v532
  %v534 = vpop.f32.mrf.mxu0
  %v535 = vadd.f32 0.0, %v534
  %536 = vdwg.mxu0
  %537 = vmatpush.bf16.msra.mxu0 %v223
  %538 = vmatpush.bf16.msra.mxu0 %v222
  %539 = vmatpush.bf16.msra.mxu0 %v221
  %540 = vmatpush.bf16.msra.mxu0 %v220
  %541 = vmatpush.bf16.msra.mxu0 %v219
  %542 = vmatpush.bf16.msra.mxu0 %v218
  %543 = vmatpush.bf16.msra.mxu0 %v217
  %544 = vmatpush.bf16.msra.mxu0 %v216
  %545 = vmatmul.bf16.gmra.mxu0 %v521
  %v546 = vpop.f32.mrf.mxu0
  %v547 = vadd.f32 %v533, %v546
  %v548 = vpop.f32.mrf.mxu0
  %v549 = vadd.f32 %v535, %v548
  %550 = vdwg.mxu0
  %551 = vmatpush.bf16.msra.mxu0 %v231
  %552 = vmatpush.bf16.msra.mxu0 %v230
  %553 = vmatpush.bf16.msra.mxu0 %v229
  %554 = vmatpush.bf16.msra.mxu0 %v228
  %555 = vmatpush.bf16.msra.mxu0 %v227
  %556 = vmatpush.bf16.msra.mxu0 %v226
  %557 = vmatpush.bf16.msra.mxu0 %v225
  %558 = vmatpush.bf16.msra.mxu0 %v224
  %559 = vmatmul.bf16.gmra.mxu0 %v522
  %v560 = vpop.f32.mrf.mxu0
  %v561 = vadd.f32 %v547, %v560
  %v562 = vpop.f32.mrf.mxu0
  %v563 = vadd.f32 %v549, %v562
  %564 = vdwg.mxu0
  %v565 = vadd.f32 %v561, %v563
  %v566 = vrot.slane %v565, 4
  %v567 = vadd.f32 %v565, %v566
  %v568 = vrot.slane %v567, 2
  %v569 = vadd.f32 %v567, %v568
  %v570 = vrot.slane %v569, 1
  %v571 = vadd.f32 %v569, %v570
  %v572 = vmul.f32 %v561, %v561
  %v573 = vmul.f32 %v563, %v563
  %v574 = vadd.f32 %v572, %v573
  %v575 = vrot.slane %v574, 4
  %v576 = vadd.f32 %v574, %v575
  %v577 = vrot.slane %v576, 2
  %v578 = vadd.f32 %v576, %v577
  %v579 = vrot.slane %v578, 1
  %v580 = vadd.f32 %v578, %v579
  %v581 = vsel %vm314, %v571, %v580
  %582 = vmatpush.msra.mxu0 %v85
  %583 = vmatpush.msra.mxu0 %v84
  %584 = vmatpush.msra.mxu0 %v83
  %585 = vmatpush.msra.mxu0 %v82
  %586 = vmatpush.msra.mxu0 %v81
  %587 = vmatpush.msra.mxu0 %v80
  %588 = vmatpush.msra.mxu0 %v79
  %589 = vmatpush.msra.mxu0 %v78
  %590 = vmatpush.msra.mxu0 %v77
  %591 = vmatpush.msra.mxu0 %v76
  %592 = vmatpush.msra.mxu0 %v75
  %593 = vmatpush.msra.mxu0 %v74
  %594 = vmatpush.msra.mxu0 %v73
  %595 = vmatpush.msra.mxu0 %v72
  %596 = vmatpush.msra.mxu0 %v71
  %597 = vmatpush.msra.mxu0 %v70
  %598 = vmatmul.f32.gmra.mxu0 %v581
  %v599 = vpop.f32.mrf.mxu0
  %v600 = vadd.f32 0.0, %v599
  %601 = vdwg.mxu0
  %v602 = vmul.f32 %v600, %v600
  %v604 = vrot.slane %v602, 7
  %v606 = vsub.f32 %v600, %v604
  %v607 = vmax.f32 %v606, 0.0
  %v608 = vadd.f32 %v607, 1e-05
  %v609 = vrsqrt.pop %v608
  %v610 = vmul.f32 %v609, %v608
  %v611 = vmul.f32 %v610, %v609
  %v612 = vmul.f32 0.5, %v611
  %v613 = vsub.f32 1.5, %v612
  %v614 = vmul.f32 %v609, %v613
  %vm615 = vweird.f32 %v608
  %vm616 = vweird.f32 %v609
  %vm617 = vmor %vm615, %vm616
  %v618 = vsel %vm617, %v609, %v614
  %620 = vst [vmem:[#allocation1] sm:$0xff] %v618
  %s621 = scalar_lea.vmem [#allocation1], 1
  %v622 = vld [vmem:[%s621] ss:$9 sm:$0xff]
  %v624 = vmul.f32 %v86, %v622
  %v625 = vmul.f32 %v600, %v624
  %v626 = vsub.f32 %v87, %v625
  %v628 = vperm.slane %v624, 0
  %v630 = vmul.f32 %v561, %v628
  %v631 = vmul.f32 %v563, %v628
  %v633 = vperm.slane %v626, 0
  %v635 = vadd.f32 %v630, %v633
  %v636 = vadd.f32 %v631, %v633
  %v637 = vmax.f32 %v635, 0.0
  %v638 = vmax.f32 %v636, 0.0
  %639 = vst [vmem:[%s5] sm:$0xff] %v637
  %640 = vst [vmem:[%s5 + $0x8] sm:$0xff] %v638
  // Predicated region
  $region22: #{rec_entity_forward.1} parent=0 // pred_check
    _
  $region23: #{rec_entity_forward.1} parent=0 // pred_check_branch
    %642 = sbr.rel (0) target = $region25
  $region24: #{rec_entity_forward.1} parent=0 // pred_region
    _
  $region25: #{rec_entity_forward.1} parent=0 // pred_fallthru
    _
  // Predicated region
  $region26: #{rec_entity_forward.1} parent=0 // pred_check
    _
  $region27: #{rec_entity_forward.1} parent=0 // pred_check_branch
    %644 = sbr.rel (0) target = $region29
  $region28: #{rec_entity_forward.1} parent=0 // pred_region
    _
  $region29: #{rec_entity_forward.1} parent=0 // pred_fallthru
    _

</llo_original>
